<compile_context>
chip_gen: v6e
topology: v6e:2x2x1
jax: 0.10.0
libtpu: 0.0.40
codegen_flags: <defaults>
</compile_context>

<pallas_src>
import jax
import jax.numpy as jnp
from jax.experimental import pallas as pl
from jax.experimental.pallas import tpu as pltpu


def _mlp_kernel(x_ref, w1_ref, b1_ref, w2_ref, b2_ref, o_ref):
    # Activation: f32 in VMEM, cast to bf16 on the VPU just before the MXU matmul.
    x_bf = x_ref[...].astype(jnp.bfloat16)
    # Hidden layer: bf16 MXU inputs, f32 accumulation; bias + ReLU on the f32 accumulator.
    h = jnp.dot(x_bf, w1_ref[...], preferred_element_type=jnp.float32)
    h = jnp.maximum(h + b1_ref[...], 0.0)
    # Output layer: cast hidden activation to bf16 only as MXU input; acc + bias in f32.
    out = jnp.dot(h.astype(jnp.bfloat16), w2_ref[...],
                  preferred_element_type=jnp.float32)
    o_ref[...] = (out + b2_ref[...]).astype(o_ref.dtype)


def prepare_material_predictor_params(w1, b1, w2, b2):
    """ONE-TIME parameter prep (call at model init, NOT per forward call).

    w1: (in_channels, 1024), b1: (1024,) or (1, 1024),
    w2: (1024, num_materials), b2: (num_materials,) or (1, num_materials).
    (PyTorch Linear weights (out, in) are assumed already transposed to (in, out).)

      * weights -> bf16, kept resident in bf16 (halves the dominant weight HBM stream),
      * biases  -> f32 row vectors (added on the f32 MXU accumulator in-kernel),
      * output dim zero-padded once to a multiple of 128 lanes (lane-dense vst).
    """
    hidden = w1.shape[1]
    num_materials = w2.shape[1]
    n_pad = max(((num_materials + 127) // 128) * 128, 128)
    b2 = b2.reshape(1, num_materials)
    if n_pad != num_materials:
        w2 = jnp.zeros((hidden, n_pad), w2.dtype).at[:, :num_materials].set(w2)
        b2 = jnp.zeros((1, n_pad), b2.dtype).at[:, :num_materials].set(b2)
    return dict(
        w1=w1.astype(jnp.bfloat16),
        b1=b1.reshape(1, hidden).astype(jnp.float32),
        w2=w2.astype(jnp.bfloat16),
        b2=b2.astype(jnp.float32),
        num_materials=num_materials,
    )


def material_predictor_forward(features, params):
    """features: (B, C, H, W) float32; params from prepare_material_predictor_params.
    Returns (B, num_materials) float32 logits."""
    B = features.shape[0]
    x = features.reshape(B, -1).astype(jnp.float32)   # flatten(start_dim=1)
    w1, b1, w2, b2 = params["w1"], params["b1"], params["w2"], params["b2"]
    num_materials = params["num_materials"]
    in_ch = x.shape[1]
    hidden = w1.shape[1]
    n_pad = w2.shape[1]

    flops = 2 * B * (in_ch * hidden + hidden * n_pad)
    bytes_accessed = (x.size * 4 + w1.size * 2 + b1.size * 4
                      + w2.size * 2 + b2.size * 4 + B * n_pad * 4)

    # VMEM budget: whole-array operands + f32 hidden-activation transient + headroom.
    # Floor at the v5e 16 MiB default (harmless for tiny shapes), cap at v7x 64 MiB physical.
    vmem_need = bytes_accessed + B * hidden * 4
    vmem_limit = int(min(max(2 * vmem_need + (1 << 20), 16 << 20), 64 << 20))

    vmem_spec = pl.BlockSpec(memory_space=pltpu.MemorySpace.VMEM)
    out_padded = pl.pallas_call(
        _mlp_kernel,
        out_shape=jax.ShapeDtypeStruct((B, n_pad), jnp.float32),
        in_specs=[vmem_spec] * 5,
        out_specs=vmem_spec,
        compiler_params=pltpu.CompilerParams(vmem_limit_bytes=vmem_limit),
        cost_estimate=pl.CostEstimate(flops=flops, transcendentals=0,
                                      bytes_accessed=bytes_accessed),
    )(x, w1, b1, w2, b2)

    return out_padded[:, :num_materials]


if __name__ == "__main__":
    # Pooled features (B, C, H, W): in_channels = C*H*W = 256.
    B, C, H, W = 8, 4, 8, 8
    in_channels = C * H * W
    hidden = 1024
    num_materials = 16

    key = jax.random.PRNGKey(0)
    k_feat, k_w1, k_b1, k_w2, k_b2 = jax.random.split(key, 5)

    features = jax.random.normal(k_feat, (B, C, H, W), dtype=jnp.float32)

    # PyTorch Linear weights (out, in) stored pre-transposed as (in, out); biases (1, out).
    w1 = (jax.random.normal(k_w1, (in_channels, hidden), dtype=jnp.float32)
          * (1.0 / jnp.sqrt(in_channels)))
    b1 = jax.random.normal(k_b1, (1, hidden), dtype=jnp.float32) * 0.01
    w2 = (jax.random.normal(k_w2, (hidden, num_materials), dtype=jnp.float32)
          * (1.0 / jnp.sqrt(hidden)))
    b2 = jax.random.normal(k_b2, (1, num_materials), dtype=jnp.float32) * 0.01

    # One-time init-path prep: bf16 weight conversion + output lane-padding.
    params = prepare_material_predictor_params(w1, b1, w2, b2)

    logits = material_predictor_forward(features, params)
    logits = jax.block_until_ready(logits)
    assert logits.shape == (B, num_materials)

    # Reference matching the kernel's numerics (bf16 MXU inputs, f32 accumulation).
    # NOTE: ~1e-2 rel. divergence from an exact f32 PyTorch Linear is expected (bf16 weights).
    x_flat = features.reshape(B, -1)
    xb = x_flat.astype(jnp.bfloat16).astype(jnp.float32)
    w1b = w1.astype(jnp.bfloat16).astype(jnp.float32)
    w2b = w2.astype(jnp.bfloat16).astype(jnp.float32)
    h_ref = jnp.maximum(xb @ w1b + b1, 0.0)
    ref = h_ref.astype(jnp.bfloat16).astype(jnp.float32) @ w2b + b2
    assert jnp.allclose(logits, ref, atol=1e-2, rtol=1e-2), (
        float(jnp.max(jnp.abs(logits - ref))))

    print("KERNEL_OK")
</pallas_src>

<mosaic_0001>
module attributes {stable_mosaic.version = 11 : i64} {
  func.func @_mlp_kernel(%arg0: memref<8x256xf32, #tpu.memory_space<vmem>>, %arg1: memref<256x1024xbf16, #tpu.memory_space<vmem>>, %arg2: memref<1x1024xf32, #tpu.memory_space<vmem>>, %arg3: memref<1024x128xbf16, #tpu.memory_space<vmem>>, %arg4: memref<1x128xf32, #tpu.memory_space<vmem>>, %arg5: memref<8x128xf32, #tpu.memory_space<vmem>>) attributes {dimension_semantics = [], scalar_prefetch = 0 : i64, scratch_operands = 0 : i64, tpu.core_type = #tpu.core_type<tc>} {
    %c0 = arith.constant 0 : index
    %c0_0 = arith.constant 0 : index
    %0 = vector.load %arg0[%c0, %c0_0] : memref<8x256xf32, #tpu.memory_space<vmem>>, vector<8x256xf32>
    %1 = arith.truncf %0 : vector<8x256xf32> to vector<8x256xbf16>
    %c0_1 = arith.constant 0 : index
    %c0_2 = arith.constant 0 : index
    %2 = vector.load %arg1[%c0_1, %c0_2] : memref<256x1024xbf16, #tpu.memory_space<vmem>>, vector<256x1024xbf16>
    %cst = arith.constant dense<0.000000e+00> : vector<8x1024xf32>
    %3 = tpu.matmul %1, %2, %cst {dimension_numbers = #tpu.dot_dimension_numbers<[1], [0], [0], [1], [0, 0, 1, 1], [], []>} : vector<8x256xbf16>, vector<256x1024xbf16>, vector<8x1024xf32> -> vector<8x1024xf32>
    %c0_3 = arith.constant 0 : index
    %c0_4 = arith.constant 0 : index
    %4 = vector.load %arg2[%c0_3, %c0_4] : memref<1x1024xf32, #tpu.memory_space<vmem>>, vector<1x1024xf32>
    %5 = vector.broadcast %4 : vector<1x1024xf32> to vector<8x1024xf32>
    %6 = arith.addf %3, %5 : vector<8x1024xf32>
    %cst_5 = arith.constant 0.000000e+00 : f32
    %7 = vector.broadcast %cst_5 : f32 to vector<8x1024xf32>
    %8 = arith.maximumf %6, %7 : vector<8x1024xf32>
    %9 = arith.truncf %8 : vector<8x1024xf32> to vector<8x1024xbf16>
    %c0_6 = arith.constant 0 : index
    %c0_7 = arith.constant 0 : index
    %10 = vector.load %arg3[%c0_6, %c0_7] : memref<1024x128xbf16, #tpu.memory_space<vmem>>, vector<1024x128xbf16>
    %cst_8 = arith.constant dense<0.000000e+00> : vector<8x128xf32>
    %11 = tpu.matmul %9, %10, %cst_8 {dimension_numbers = #tpu.dot_dimension_numbers<[1], [0], [0], [1], [0, 0, 1, 1], [], []>} : vector<8x1024xbf16>, vector<1024x128xbf16>, vector<8x128xf32> -> vector<8x128xf32>
    %c0_9 = arith.constant 0 : index
    %c0_10 = arith.constant 0 : index
    %12 = vector.load %arg4[%c0_9, %c0_10] : memref<1x128xf32, #tpu.memory_space<vmem>>, vector<1x128xf32>
    %13 = vector.broadcast %12 : vector<1x128xf32> to vector<8x128xf32>
    %14 = arith.addf %11, %13 : vector<8x128xf32>
    %c0_11 = arith.constant 0 : index
    %c0_12 = arith.constant 0 : index
    %15 = vector.load %arg5[%c0_11, %c0_12] : memref<8x128xf32, #tpu.memory_space<vmem>>, vector<8x128xf32>
    tpu.vector_store %arg5[%c0_11, %c0_12], %14 {strides = array<i32>} : memref<8x128xf32, #tpu.memory_space<vmem>>, vector<8x128xf32>,
    return
  }
}

</mosaic_0001>

<llo_original>
// kernel: tpu_custom_call.1
$region0: #{tpu_custom_call.1}
  #allocation0 [shape = 'u32[]', space=smem, size = 0x4, offset = 0x4, fixed_abs, tag = 'smem constant byte address 0x4 - core index']
  #allocation1 [shape = 'u32[144,128]{1,0:T(1,128)}', space=vmem, size = 0x12000, scoped, tag = 'internal scratch']
  %s0 = inlined_call_operand.hbm [shape: f32[8,256], index: 0, kind: input, shape index: {}]
  %s1 = inlined_call_operand.hbm [shape: bf16[256,1024], index: 1, kind: input, shape index: {}]
  %s2 = inlined_call_operand.hbm [shape: f32[1,1024], index: 2, kind: input, shape index: {}]
  %s3 = inlined_call_operand.hbm [shape: bf16[1024,128], index: 3, kind: input, shape index: {}]
  %s4 = inlined_call_operand.vmem [shape: f32[1,128], index: 4, kind: input, shape index: {}]
  %s5 = inlined_call_operand.hbm [shape: f32[8,128], index: 5, kind: output, shape index: {}]
  %s6 = sld [smem:[#allocation0]]
  $region46: #{tpu_custom_call.1} parent=0
    _
  %s8 = ssub.s32 1, %s6
  %s9 = scalar_select 0, %s8, %s6
  $region1: #{tpu_custom_call.1} parent=0
    #allocation2 [shape = 'u8[8192]{0}', space=vmem, size = 0x2000, scoped, tag = 'input window, operand 0, single buffered']
    #allocation3 [shape = 's32[1]{0}', space=sflag, size = 0x4, scoped, tag = 'scoped memory for tpu_custom_call.1']
    #allocation4 [shape = 's32[1]{0}', space=sflag, size = 0x4, scoped, tag = 'scoped memory for tpu_custom_call.1']
    #allocation5 [shape = 'u8[524288]{0}', space=vmem, size = 0x80000, scoped, tag = 'input window, operand 1, single buffered']
    #allocation6 [shape = 's32[1]{0}', space=sflag, size = 0x4, scoped, tag = 'scoped memory for tpu_custom_call.1']
    #allocation7 [shape = 'u8[4096]{0}', space=vmem, size = 0x1000, scoped, tag = 'input window, operand 2, single buffered']
    #allocation8 [shape = 'u8[262144]{0}', space=vmem, size = 0x40000, scoped, tag = 'input window, operand 3, single buffered']
    #allocation9 [shape = 's32[1]{0}', space=sflag, size = 0x4, scoped, tag = 'scoped memory for tpu_custom_call.1']
    #allocation10 [shape = 'u8[4096]{0}', space=vmem, size = 0x1000, scoped, tag = 'output window, operand 0, single buffered']
    %10 = vsyncpa [#allocation3], 0
    %11 = vsyncpa [#allocation6], 0
    %12 = vsyncpa [#allocation9], 0
    %13 = vsyncpa [#allocation4], 0
    // Predicated region
    $region2: #{tpu_custom_call.1} parent=1 // pred_check
      _
    $region3: #{tpu_custom_call.1} parent=1 // pred_check_branch
      %15 = sbr.rel (0) target = $region5
    $region4: #{tpu_custom_call.1} parent=1 // pred_region
      %s17 = ssub.s32 256, 256
      %18 = vsyncadd [#allocation3], %s17
      %s20 = sshll.u32 [#allocation2], 4
      %s21 = int_to_ptr.vmem [resolvable:$true] %s20
      %23 = dma.hbm_to_vmem [thread:$0]  %s0, 256, %s21, [#allocation3]
    $region5: #{tpu_custom_call.1} parent=1 // pred_fallthru
      _
    // Predicated region
    $region6: #{tpu_custom_call.1} parent=1 // pred_check
      _
    $region7: #{tpu_custom_call.1} parent=1 // pred_check_branch
      %25 = sbr.rel (0) target = $region9
    $region8: #{tpu_custom_call.1} parent=1 // pred_region
      %s27 = ssub.s32 16384, 16384
      %28 = vsyncadd [#allocation6], %s27
      %s29 = sshll.u32 [#allocation5], 4
      %s30 = int_to_ptr.vmem [resolvable:$true] %s29
      %35 = dma.hbm_to_vmem [thread:$0]  %s1, 16384, %s30, [#allocation6], 512, 512, 32
    $region9: #{tpu_custom_call.1} parent=1 // pred_fallthru
      _
    // Predicated region
    $region10: #{tpu_custom_call.1} parent=1 // pred_check
      _
    $region11: #{tpu_custom_call.1} parent=1 // pred_check_branch
      %37 = sbr.rel (0) target = $region13
    $region12: #{tpu_custom_call.1} parent=1 // pred_region
      %s39 = ssub.s32 128, 128
      %40 = vsyncadd [#allocation6], %s39
      %s42 = sshll.u32 [#allocation7], 4
      %s43 = int_to_ptr.vmem [resolvable:$true] %s42
      %45 = dma.hbm_to_vmem [thread:$0]  %s2, 128, %s43, [#allocation6]
    $region13: #{tpu_custom_call.1} parent=1 // pred_fallthru
      _
    // Predicated region
    $region14: #{tpu_custom_call.1} parent=1 // pred_check
      _
    $region15: #{tpu_custom_call.1} parent=1 // pred_check_branch
      %47 = sbr.rel (0) target = $region17
    $region16: #{tpu_custom_call.1} parent=1 // pred_region
      %s49 = ssub.s32 8192, 8192
      %50 = vsyncadd [#allocation9], %s49
      %s51 = sshll.u32 [#allocation8], 4
      %s52 = int_to_ptr.vmem [resolvable:$true] %s51
      %57 = dma.hbm_to_vmem [thread:$0]  %s3, 8192, %s52, [#allocation9], 64, 64, 4
    $region17: #{tpu_custom_call.1} parent=1 // pred_fallthru
      _
    // Predicated region
    $region18: #{tpu_custom_call.1} parent=1 // pred_check
      _
    $region19: #{tpu_custom_call.1} parent=1 // pred_check_branch
      %59 = sbr.rel (0) target = $region21
    $region20: #{tpu_custom_call.1} parent=1 // pred_region
      _
    $region21: #{tpu_custom_call.1} parent=1 // pred_fallthru
      _
    // Predicated region
    $region22: #{tpu_custom_call.1} parent=1 // pred_check
      _
    $region23: #{tpu_custom_call.1} parent=1 // pred_check_branch
      %61 = sbr.rel (0) target = $region25
    $region24: #{tpu_custom_call.1} parent=1 // pred_region
      %62 = dma.done [#allocation3], 256
    $region25: #{tpu_custom_call.1} parent=1 // pred_fallthru
      _
    // Predicated region
    $region26: #{tpu_custom_call.1} parent=1 // pred_check
      _
    $region27: #{tpu_custom_call.1} parent=1 // pred_check_branch
      %64 = sbr.rel (0) target = $region29
    $region28: #{tpu_custom_call.1} parent=1 // pred_region
      %65 = dma.done [#allocation6], 16384
    $region29: #{tpu_custom_call.1} parent=1 // pred_fallthru
      _
    // Predicated region
    $region30: #{tpu_custom_call.1} parent=1 // pred_check
      _
    $region31: #{tpu_custom_call.1} parent=1 // pred_check_branch
      %67 = sbr.rel (0) target = $region33
    $region32: #{tpu_custom_call.1} parent=1 // pred_region
      %68 = dma.done [#allocation6], 128
    $region33: #{tpu_custom_call.1} parent=1 // pred_fallthru
      _
    // Predicated region
    $region34: #{tpu_custom_call.1} parent=1 // pred_check
      _
    $region35: #{tpu_custom_call.1} parent=1 // pred_check_branch
      %70 = sbr.rel (0) target = $region37
    $region36: #{tpu_custom_call.1} parent=1 // pred_region
      %71 = dma.done [#allocation9], 8192
    $region37: #{tpu_custom_call.1} parent=1 // pred_fallthru
      _
    %v73 = vld [vmem:[#allocation2] sm:$0xff]
    %v74 = vld [vmem:[#allocation2 + $0x8] sm:$0xff]
    %v75 = vpack.c.bf16 %v73, %v73
    %v76 = vpack.c.bf16 %v74, %v74
    %v77 = vld [vmem:[#allocation5] sm:$0xff]
    %v78 = vld [vmem:[#allocation5 + $0x8] sm:$0xff]
    %v79 = vld [vmem:[#allocation5 + $0x10] sm:$0xff]
    %v80 = vld [vmem:[#allocation5 + $0x18] sm:$0xff]
    %v81 = vld [vmem:[#allocation5 + $0x20] sm:$0xff]
    %v82 = vld [vmem:[#allocation5 + $0x28] sm:$0xff]
    %v83 = vld [vmem:[#allocation5 + $0x30] sm:$0xff]
    %v84 = vld [vmem:[#allocation5 + $0x38] sm:$0xff]
    %v85 = vld [vmem:[#allocation5 + $0x40] sm:$0xff]
    %v86 = vld [vmem:[#allocation5 + $0x48] sm:$0xff]
    %v87 = vld [vmem:[#allocation5 + $0x50] sm:$0xff]
    %v88 = vld [vmem:[#allocation5 + $0x58] sm:$0xff]
    %v89 = vld [vmem:[#allocation5 + $0x60] sm:$0xff]
    %v90 = vld [vmem:[#allocation5 + $0x68] sm:$0xff]
    %v91 = vld [vmem:[#allocation5 + $0x70] sm:$0xff]
    %v92 = vld [vmem:[#allocation5 + $0x78] sm:$0xff]
    %v93 = vld [vmem:[#allocation5 + $0x80] sm:$0xff]
    %v94 = vld [vmem:[#allocation5 + $0x88] sm:$0xff]
    %v95 = vld [vmem:[#allocation5 + $0x90] sm:$0xff]
    %v96 = vld [vmem:[#allocation5 + $0x98] sm:$0xff]
    %v97 = vld [vmem:[#allocation5 + $0xa0] sm:$0xff]
    %v98 = vld [vmem:[#allocation5 + $0xa8] sm:$0xff]
    %v99 = vld [vmem:[#allocation5 + $0xb0] sm:$0xff]
    %v100 = vld [vmem:[#allocation5 + $0xb8] sm:$0xff]
    %v101 = vld [vmem:[#allocation5 + $0xc0] sm:$0xff]
    %v102 = vld [vmem:[#allocation5 + $0xc8] sm:$0xff]
    %v103 = vld [vmem:[#allocation5 + $0xd0] sm:$0xff]
    %v104 = vld [vmem:[#allocation5 + $0xd8] sm:$0xff]
    %v105 = vld [vmem:[#allocation5 + $0xe0] sm:$0xff]
    %v106 = vld [vmem:[#allocation5 + $0xe8] sm:$0xff]
    %v107 = vld [vmem:[#allocation5 + $0xf0] sm:$0xff]
    %v108 = vld [vmem:[#allocation5 + $0xf8] sm:$0xff]
    %v109 = vld [vmem:[#allocation5 + $0x100] sm:$0xff]
    %v110 = vld [vmem:[#allocation5 + $0x108] sm:$0xff]
    %v111 = vld [vmem:[#allocation5 + $0x110] sm:$0xff]
    %v112 = vld [vmem:[#allocation5 + $0x118] sm:$0xff]
    %v113 = vld [vmem:[#allocation5 + $0x120] sm:$0xff]
    %v114 = vld [vmem:[#allocation5 + $0x128] sm:$0xff]
    %v115 = vld [vmem:[#allocation5 + $0x130] sm:$0xff]
    %v116 = vld [vmem:[#allocation5 + $0x138] sm:$0xff]
    %v117 = vld [vmem:[#allocation5 + $0x140] sm:$0xff]
    %v118 = vld [vmem:[#allocation5 + $0x148] sm:$0xff]
    %v119 = vld [vmem:[#allocation5 + $0x150] sm:$0xff]
    %v120 = vld [vmem:[#allocation5 + $0x158] sm:$0xff]
    %v121 = vld [vmem:[#allocation5 + $0x160] sm:$0xff]
    %v122 = vld [vmem:[#allocation5 + $0x168] sm:$0xff]
    %v123 = vld [vmem:[#allocation5 + $0x170] sm:$0xff]
    %v124 = vld [vmem:[#allocation5 + $0x178] sm:$0xff]
    %v125 = vld [vmem:[#allocation5 + $0x180] sm:$0xff]
    %v126 = vld [vmem:[#allocation5 + $0x188] sm:$0xff]
    %v127 = vld [vmem:[#allocation5 + $0x190] sm:$0xff]
    %v128 = vld [vmem:[#allocation5 + $0x198] sm:$0xff]
    %v129 = vld [vmem:[#allocation5 + $0x1a0] sm:$0xff]
    %v130 = vld [vmem:[#allocation5 + $0x1a8] sm:$0xff]
    %v131 = vld [vmem:[#allocation5 + $0x1b0] sm:$0xff]
    %v132 = vld [vmem:[#allocation5 + $0x1b8] sm:$0xff]
    %v133 = vld [vmem:[#allocation5 + $0x1c0] sm:$0xff]
    %v134 = vld [vmem:[#allocation5 + $0x1c8] sm:$0xff]
    %v135 = vld [vmem:[#allocation5 + $0x1d0] sm:$0xff]
    %v136 = vld [vmem:[#allocation5 + $0x1d8] sm:$0xff]
    %v137 = vld [vmem:[#allocation5 + $0x1e0] sm:$0xff]
    %v138 = vld [vmem:[#allocation5 + $0x1e8] sm:$0xff]
    %v139 = vld [vmem:[#allocation5 + $0x1f0] sm:$0xff]
    %v140 = vld [vmem:[#allocation5 + $0x1f8] sm:$0xff]
    %v141 = vld [vmem:[#allocation5 + $0x200] sm:$0xff]
    %v142 = vld [vmem:[#allocation5 + $0x208] sm:$0xff]
    %v143 = vld [vmem:[#allocation5 + $0x210] sm:$0xff]
    %v144 = vld [vmem:[#allocation5 + $0x218] sm:$0xff]
    %v145 = vld [vmem:[#allocation5 + $0x220] sm:$0xff]
    %v146 = vld [vmem:[#allocation5 + $0x228] sm:$0xff]
    %v147 = vld [vmem:[#allocation5 + $0x230] sm:$0xff]
    %v148 = vld [vmem:[#allocation5 + $0x238] sm:$0xff]
    %v149 = vld [vmem:[#allocation5 + $0x240] sm:$0xff]
    %v150 = vld [vmem:[#allocation5 + $0x248] sm:$0xff]
    %v151 = vld [vmem:[#allocation5 + $0x250] sm:$0xff]
    %v152 = vld [vmem:[#allocation5 + $0x258] sm:$0xff]
    %v153 = vld [vmem:[#allocation5 + $0x260] sm:$0xff]
    %v154 = vld [vmem:[#allocation5 + $0x268] sm:$0xff]
    %v155 = vld [vmem:[#allocation5 + $0x270] sm:$0xff]
    %v156 = vld [vmem:[#allocation5 + $0x278] sm:$0xff]
    %v157 = vld [vmem:[#allocation5 + $0x280] sm:$0xff]
    %v158 = vld [vmem:[#allocation5 + $0x288] sm:$0xff]
    %v159 = vld [vmem:[#allocation5 + $0x290] sm:$0xff]
    %v160 = vld [vmem:[#allocation5 + $0x298] sm:$0xff]
    %v161 = vld [vmem:[#allocation5 + $0x2a0] sm:$0xff]
    %v162 = vld [vmem:[#allocation5 + $0x2a8] sm:$0xff]
    %v163 = vld [vmem:[#allocation5 + $0x2b0] sm:$0xff]
    %v164 = vld [vmem:[#allocation5 + $0x2b8] sm:$0xff]
    %v165 = vld [vmem:[#allocation5 + $0x2c0] sm:$0xff]
    %v166 = vld [vmem:[#allocation5 + $0x2c8] sm:$0xff]
    %v167 = vld [vmem:[#allocation5 + $0x2d0] sm:$0xff]
    %v168 = vld [vmem:[#allocation5 + $0x2d8] sm:$0xff]
    %v169 = vld [vmem:[#allocation5 + $0x2e0] sm:$0xff]
    %v170 = vld [vmem:[#allocation5 + $0x2e8] sm:$0xff]
    %v171 = vld [vmem:[#allocation5 + $0x2f0] sm:$0xff]
    %v172 = vld [vmem:[#allocation5 + $0x2f8] sm:$0xff]
    %v173 = vld [vmem:[#allocation5 + $0x300] sm:$0xff]
    %v174 = vld [vmem:[#allocation5 + $0x308] sm:$0xff]
    %v175 = vld [vmem:[#allocation5 + $0x310] sm:$0xff]
    %v176 = vld [vmem:[#allocation5 + $0x318] sm:$0xff]
    %v177 = vld [vmem:[#allocation5 + $0x320] sm:$0xff]
    %v178 = vld [vmem:[#allocation5 + $0x328] sm:$0xff]
    %v179 = vld [vmem:[#allocation5 + $0x330] sm:$0xff]
    %v180 = vld [vmem:[#allocation5 + $0x338] sm:$0xff]
    %v181 = vld [vmem:[#allocation5 + $0x340] sm:$0xff]
    %v182 = vld [vmem:[#allocation5 + $0x348] sm:$0xff]
    %v183 = vld [vmem:[#allocation5 + $0x350] sm:$0xff]
    %v184 = vld [vmem:[#allocation5 + $0x358] sm:$0xff]
    %v185 = vld [vmem:[#allocation5 + $0x360] sm:$0xff]
    %v186 = vld [vmem:[#allocation5 + $0x368] sm:$0xff]
    %v187 = vld [vmem:[#allocation5 + $0x370] sm:$0xff]
    %v188 = vld [vmem:[#allocation5 + $0x378] sm:$0xff]
    %v189 = vld [vmem:[#allocation5 + $0x380] sm:$0xff]
    %v190 = vld [vmem:[#allocation5 + $0x388] sm:$0xff]
    %v191 = vld [vmem:[#allocation5 + $0x390] sm:$0xff]
    %v192 = vld [vmem:[#allocation5 + $0x398] sm:$0xff]
    %v193 = vld [vmem:[#allocation5 + $0x3a0] sm:$0xff]
    %v194 = vld [vmem:[#allocation5 + $0x3a8] sm:$0xff]
    %v195 = vld [vmem:[#allocation5 + $0x3b0] sm:$0xff]
    %v196 = vld [vmem:[#allocation5 + $0x3b8] sm:$0xff]
    %v197 = vld [vmem:[#allocation5 + $0x3c0] sm:$0xff]
    %v198 = vld [vmem:[#allocation5 + $0x3c8] sm:$0xff]
    %v199 = vld [vmem:[#allocation5 + $0x3d0] sm:$0xff]
    %v200 = vld [vmem:[#allocation5 + $0x3d8] sm:$0xff]
    %v201 = vld [vmem:[#allocation5 + $0x3e0] sm:$0xff]
    %v202 = vld [vmem:[#allocation5 + $0x3e8] sm:$0xff]
    %v203 = vld [vmem:[#allocation5 + $0x3f0] sm:$0xff]
    %v204 = vld [vmem:[#allocation5 + $0x3f8] sm:$0xff]
    %v205 = vld [vmem:[#allocation7] sm:$0xff]
    %v207 = vlaneseq
    %v208 = vshrl.u32 %v207, 7
    %v209 = vsub.s32 0, %v208
    %v210 = vrot.slane %v205, %v209
    %v211 = vlaneseq
    %v212 = vshrl.u32 %v211, 7
    %v213 = vsub.s32 1, %v212
    %v214 = vrot.slane %v205, %v213
    %v215 = vlaneseq
    %v216 = vshrl.u32 %v215, 7
    %v217 = vsub.s32 2, %v216
    %v218 = vrot.slane %v205, %v217
    %v219 = vlaneseq
    %v220 = vshrl.u32 %v219, 7
    %v221 = vsub.s32 3, %v220
    %v222 = vrot.slane %v205, %v221
    %v223 = vlaneseq
    %v224 = vshrl.u32 %v223, 7
    %v225 = vsub.s32 4, %v224
    %v226 = vrot.slane %v205, %v225
    %v227 = vlaneseq
    %v228 = vshrl.u32 %v227, 7
    %v229 = vsub.s32 5, %v228
    %v230 = vrot.slane %v205, %v229
    %v231 = vlaneseq
    %v232 = vshrl.u32 %v231, 7
    %v233 = vsub.s32 6, %v232
    %v234 = vrot.slane %v205, %v233
    %v235 = vlaneseq
    %v236 = vshrl.u32 %v235, 7
    %v237 = vsub.s32 7, %v236
    %v238 = vrot.slane %v205, %v237
    %v375 = vunpack.c.l.b16 %v77
    %v376 = vunpack.c.h.b16 %v77
    %v377 = vunpack.c.l.b16 %v78
    %v378 = vunpack.c.h.b16 %v78
    %v379 = vunpack.c.l.b16 %v79
    %v380 = vunpack.c.h.b16 %v79
    %v381 = vunpack.c.l.b16 %v80
    %v382 = vunpack.c.h.b16 %v80
    %v383 = vunpack.c.l.b16 %v81
    %v384 = vunpack.c.h.b16 %v81
    %v385 = vunpack.c.l.b16 %v82
    %v386 = vunpack.c.h.b16 %v82
    %v387 = vunpack.c.l.b16 %v83
    %v388 = vunpack.c.h.b16 %v83
    %v389 = vunpack.c.l.b16 %v84
    %v390 = vunpack.c.h.b16 %v84
    %v391 = vunpack.c.l.b16 %v85
    %v392 = vunpack.c.h.b16 %v85
    %v393 = vunpack.c.l.b16 %v86
    %v394 = vunpack.c.h.b16 %v86
    %v395 = vunpack.c.l.b16 %v87
    %v396 = vunpack.c.h.b16 %v87
    %v397 = vunpack.c.l.b16 %v88
    %v398 = vunpack.c.h.b16 %v88
    %v399 = vunpack.c.l.b16 %v89
    %v400 = vunpack.c.h.b16 %v89
    %v401 = vunpack.c.l.b16 %v90
    %v402 = vunpack.c.h.b16 %v90
    %v403 = vunpack.c.l.b16 %v91
    %v404 = vunpack.c.h.b16 %v91
    %v405 = vunpack.c.l.b16 %v92
    %v406 = vunpack.c.h.b16 %v92
    %v407 = vunpack.c.l.b16 %v93
    %v408 = vunpack.c.h.b16 %v93
    %v409 = vunpack.c.l.b16 %v94
    %v410 = vunpack.c.h.b16 %v94
    %v411 = vunpack.c.l.b16 %v95
    %v412 = vunpack.c.h.b16 %v95
    %v413 = vunpack.c.l.b16 %v96
    %v414 = vunpack.c.h.b16 %v96
    %v415 = vunpack.c.l.b16 %v97
    %v416 = vunpack.c.h.b16 %v97
    %v417 = vunpack.c.l.b16 %v98
    %v418 = vunpack.c.h.b16 %v98
    %v419 = vunpack.c.l.b16 %v99
    %v420 = vunpack.c.h.b16 %v99
    %v421 = vunpack.c.l.b16 %v100
    %v422 = vunpack.c.h.b16 %v100
    %v423 = vunpack.c.l.b16 %v101
    %v424 = vunpack.c.h.b16 %v101
    %v425 = vunpack.c.l.b16 %v102
    %v426 = vunpack.c.h.b16 %v102
    %v427 = vunpack.c.l.b16 %v103
    %v428 = vunpack.c.h.b16 %v103
    %v429 = vunpack.c.l.b16 %v104
    %v430 = vunpack.c.h.b16 %v104
    %v431 = vunpack.c.l.b16 %v105
    %v432 = vunpack.c.h.b16 %v105
    %v433 = vunpack.c.l.b16 %v106
    %v434 = vunpack.c.h.b16 %v106
    %v435 = vunpack.c.l.b16 %v107
    %v436 = vunpack.c.h.b16 %v107
    %v437 = vunpack.c.l.b16 %v108
    %v438 = vunpack.c.h.b16 %v108
    %v439 = vunpack.c.l.b16 %v109
    %v440 = vunpack.c.h.b16 %v109
    %v441 = vunpack.c.l.b16 %v110
    %v442 = vunpack.c.h.b16 %v110
    %v443 = vunpack.c.l.b16 %v111
    %v444 = vunpack.c.h.b16 %v111
    %v445 = vunpack.c.l.b16 %v112
    %v446 = vunpack.c.h.b16 %v112
    %v447 = vunpack.c.l.b16 %v113
    %v448 = vunpack.c.h.b16 %v113
    %v449 = vunpack.c.l.b16 %v114
    %v450 = vunpack.c.h.b16 %v114
    %v451 = vunpack.c.l.b16 %v115
    %v452 = vunpack.c.h.b16 %v115
    %v453 = vunpack.c.l.b16 %v116
    %v454 = vunpack.c.h.b16 %v116
    %v455 = vunpack.c.l.b16 %v117
    %v456 = vunpack.c.h.b16 %v117
    %v457 = vunpack.c.l.b16 %v118
    %v458 = vunpack.c.h.b16 %v118
    %v459 = vunpack.c.l.b16 %v119
    %v460 = vunpack.c.h.b16 %v119
    %v461 = vunpack.c.l.b16 %v120
    %v462 = vunpack.c.h.b16 %v120
    %v463 = vunpack.c.l.b16 %v121
    %v464 = vunpack.c.h.b16 %v121
    %v465 = vunpack.c.l.b16 %v122
    %v466 = vunpack.c.h.b16 %v122
    %v467 = vunpack.c.l.b16 %v123
    %v468 = vunpack.c.h.b16 %v123
    %v469 = vunpack.c.l.b16 %v124
    %v470 = vunpack.c.h.b16 %v124
    %v471 = vunpack.c.l.b16 %v125
    %v472 = vunpack.c.h.b16 %v125
    %v473 = vunpack.c.l.b16 %v126
    %v474 = vunpack.c.h.b16 %v126
    %v475 = vunpack.c.l.b16 %v127
    %v476 = vunpack.c.h.b16 %v127
    %v477 = vunpack.c.l.b16 %v128
    %v478 = vunpack.c.h.b16 %v128
    %v479 = vunpack.c.l.b16 %v129
    %v480 = vunpack.c.h.b16 %v129
    %v481 = vunpack.c.l.b16 %v130
    %v482 = vunpack.c.h.b16 %v130
    %v483 = vunpack.c.l.b16 %v131
    %v484 = vunpack.c.h.b16 %v131
    %v485 = vunpack.c.l.b16 %v132
    %v486 = vunpack.c.h.b16 %v132
    %v487 = vunpack.c.l.b16 %v133
    %v488 = vunpack.c.h.b16 %v133
    %v489 = vunpack.c.l.b16 %v134
    %v490 = vunpack.c.h.b16 %v134
    %v491 = vunpack.c.l.b16 %v135
    %v492 = vunpack.c.h.b16 %v135
    %v493 = vunpack.c.l.b16 %v136
    %v494 = vunpack.c.h.b16 %v136
    %v495 = vunpack.c.l.b16 %v137
    %v496 = vunpack.c.h.b16 %v137
    %v497 = vunpack.c.l.b16 %v138
    %v498 = vunpack.c.h.b16 %v138
    %v499 = vunpack.c.l.b16 %v139
    %v500 = vunpack.c.h.b16 %v139
    %v501 = vunpack.c.l.b16 %v140
    %v502 = vunpack.c.h.b16 %v140
    %v503 = vunpack.c.l.b16 %v141
    %v504 = vunpack.c.h.b16 %v141
    %v505 = vunpack.c.l.b16 %v142
    %v506 = vunpack.c.h.b16 %v142
    %v507 = vunpack.c.l.b16 %v143
    %v508 = vunpack.c.h.b16 %v143
    %v509 = vunpack.c.l.b16 %v144
    %v510 = vunpack.c.h.b16 %v144
    %v511 = vunpack.c.l.b16 %v145
    %v512 = vunpack.c.h.b16 %v145
    %v513 = vunpack.c.l.b16 %v146
    %v514 = vunpack.c.h.b16 %v146
    %v515 = vunpack.c.l.b16 %v147
    %v516 = vunpack.c.h.b16 %v147
    %v517 = vunpack.c.l.b16 %v148
    %v518 = vunpack.c.h.b16 %v148
    %v519 = vunpack.c.l.b16 %v149
    %v520 = vunpack.c.h.b16 %v149
    %v521 = vunpack.c.l.b16 %v150
    %v522 = vunpack.c.h.b16 %v150
    %v523 = vunpack.c.l.b16 %v151
    %v524 = vunpack.c.h.b16 %v151
    %v525 = vunpack.c.l.b16 %v152
    %v526 = vunpack.c.h.b16 %v152
    %v527 = vunpack.c.l.b16 %v153
    %v528 = vunpack.c.h.b16 %v153
    %v529 = vunpack.c.l.b16 %v154
    %v530 = vunpack.c.h.b16 %v154
    %v531 = vunpack.c.l.b16 %v155
    %v532 = vunpack.c.h.b16 %v155
    %v533 = vunpack.c.l.b16 %v156
    %v534 = vunpack.c.h.b16 %v156
    %v535 = vunpack.c.l.b16 %v157
    %v536 = vunpack.c.h.b16 %v157
    %v537 = vunpack.c.l.b16 %v158
    %v538 = vunpack.c.h.b16 %v158
    %v539 = vunpack.c.l.b16 %v159
    %v540 = vunpack.c.h.b16 %v159
    %v541 = vunpack.c.l.b16 %v160
    %v542 = vunpack.c.h.b16 %v160
    %v543 = vunpack.c.l.b16 %v161
    %v544 = vunpack.c.h.b16 %v161
    %v545 = vunpack.c.l.b16 %v162
    %v546 = vunpack.c.h.b16 %v162
    %v547 = vunpack.c.l.b16 %v163
    %v548 = vunpack.c.h.b16 %v163
    %v549 = vunpack.c.l.b16 %v164
    %v550 = vunpack.c.h.b16 %v164
    %v551 = vunpack.c.l.b16 %v165
    %v552 = vunpack.c.h.b16 %v165
    %v553 = vunpack.c.l.b16 %v166
    %v554 = vunpack.c.h.b16 %v166
    %v555 = vunpack.c.l.b16 %v167
    %v556 = vunpack.c.h.b16 %v167
    %v557 = vunpack.c.l.b16 %v168
    %v558 = vunpack.c.h.b16 %v168
    %v559 = vunpack.c.l.b16 %v169
    %v560 = vunpack.c.h.b16 %v169
    %v561 = vunpack.c.l.b16 %v170
    %v562 = vunpack.c.h.b16 %v170
    %v563 = vunpack.c.l.b16 %v171
    %v564 = vunpack.c.h.b16 %v171
    %v565 = vunpack.c.l.b16 %v172
    %v566 = vunpack.c.h.b16 %v172
    %v567 = vunpack.c.l.b16 %v173
    %v568 = vunpack.c.h.b16 %v173
    %v569 = vunpack.c.l.b16 %v174
    %v570 = vunpack.c.h.b16 %v174
    %v571 = vunpack.c.l.b16 %v175
    %v572 = vunpack.c.h.b16 %v175
    %v573 = vunpack.c.l.b16 %v176
    %v574 = vunpack.c.h.b16 %v176
    %v575 = vunpack.c.l.b16 %v177
    %v576 = vunpack.c.h.b16 %v177
    %v577 = vunpack.c.l.b16 %v178
    %v578 = vunpack.c.h.b16 %v178
    %v579 = vunpack.c.l.b16 %v179
    %v580 = vunpack.c.h.b16 %v179
    %v581 = vunpack.c.l.b16 %v180
    %v582 = vunpack.c.h.b16 %v180
    %v583 = vunpack.c.l.b16 %v181
    %v584 = vunpack.c.h.b16 %v181
    %v585 = vunpack.c.l.b16 %v182
    %v586 = vunpack.c.h.b16 %v182
    %v587 = vunpack.c.l.b16 %v183
    %v588 = vunpack.c.h.b16 %v183
    %v589 = vunpack.c.l.b16 %v184
    %v590 = vunpack.c.h.b16 %v184
    %v591 = vunpack.c.l.b16 %v185
    %v592 = vunpack.c.h.b16 %v185
    %v593 = vunpack.c.l.b16 %v186
    %v594 = vunpack.c.h.b16 %v186
    %v595 = vunpack.c.l.b16 %v187
    %v596 = vunpack.c.h.b16 %v187
    %v597 = vunpack.c.l.b16 %v188
    %v598 = vunpack.c.h.b16 %v188
    %v599 = vunpack.c.l.b16 %v189
    %v600 = vunpack.c.h.b16 %v189
    %v601 = vunpack.c.l.b16 %v190
    %v602 = vunpack.c.h.b16 %v190
    %v603 = vunpack.c.l.b16 %v191
    %v604 = vunpack.c.h.b16 %v191
    %v605 = vunpack.c.l.b16 %v192
    %v606 = vunpack.c.h.b16 %v192
    %v607 = vunpack.c.l.b16 %v193
    %v608 = vunpack.c.h.b16 %v193
    %v609 = vunpack.c.l.b16 %v194
    %v610 = vunpack.c.h.b16 %v194
    %v611 = vunpack.c.l.b16 %v195
    %v612 = vunpack.c.h.b16 %v195
    %v613 = vunpack.c.l.b16 %v196
    %v614 = vunpack.c.h.b16 %v196
    %v615 = vunpack.c.l.b16 %v197
    %v616 = vunpack.c.h.b16 %v197
    %v617 = vunpack.c.l.b16 %v198
    %v618 = vunpack.c.h.b16 %v198
    %v619 = vunpack.c.l.b16 %v199
    %v620 = vunpack.c.h.b16 %v199
    %v621 = vunpack.c.l.b16 %v200
    %v622 = vunpack.c.h.b16 %v200
    %v623 = vunpack.c.l.b16 %v201
    %v624 = vunpack.c.h.b16 %v201
    %v625 = vunpack.c.l.b16 %v202
    %v626 = vunpack.c.h.b16 %v202
    %v627 = vunpack.c.l.b16 %v203
    %v628 = vunpack.c.h.b16 %v203
    %v629 = vunpack.c.l.b16 %v204
    %v630 = vunpack.c.h.b16 %v204
    %v631 = vpack.c.b16 %v383, %v375
    %v632 = vpack.c.b16 %v384, %v376
    %v633 = vpack.c.b16 %v385, %v377
    %v634 = vpack.c.b16 %v386, %v378
    %v635 = vpack.c.b16 %v387, %v379
    %v636 = vpack.c.b16 %v388, %v380
    %v637 = vpack.c.b16 %v389, %v381
    %v638 = vpack.c.b16 %v390, %v382
    %v639 = vpack.c.b16 %v399, %v391
    %v640 = vpack.c.b16 %v400, %v392
    %v641 = vpack.c.b16 %v401, %v393
    %v642 = vpack.c.b16 %v402, %v394
    %v643 = vpack.c.b16 %v403, %v395
    %v644 = vpack.c.b16 %v404, %v396
    %v645 = vpack.c.b16 %v405, %v397
    %v646 = vpack.c.b16 %v406, %v398
    %v647 = vpack.c.b16 %v415, %v407
    %v648 = vpack.c.b16 %v416, %v408
    %v649 = vpack.c.b16 %v417, %v409
    %v650 = vpack.c.b16 %v418, %v410
    %v651 = vpack.c.b16 %v419, %v411
    %v652 = vpack.c.b16 %v420, %v412
    %v653 = vpack.c.b16 %v421, %v413
    %v654 = vpack.c.b16 %v422, %v414
    %v655 = vpack.c.b16 %v431, %v423
    %v656 = vpack.c.b16 %v432, %v424
    %v657 = vpack.c.b16 %v433, %v425
    %v658 = vpack.c.b16 %v434, %v426
    %v659 = vpack.c.b16 %v435, %v427
    %v660 = vpack.c.b16 %v436, %v428
    %v661 = vpack.c.b16 %v437, %v429
    %v662 = vpack.c.b16 %v438, %v430
    %v663 = vpack.c.b16 %v447, %v439
    %v664 = vpack.c.b16 %v448, %v440
    %v665 = vpack.c.b16 %v449, %v441
    %v666 = vpack.c.b16 %v450, %v442
    %v667 = vpack.c.b16 %v451, %v443
    %v668 = vpack.c.b16 %v452, %v444
    %v669 = vpack.c.b16 %v453, %v445
    %v670 = vpack.c.b16 %v454, %v446
    %v671 = vpack.c.b16 %v463, %v455
    %v672 = vpack.c.b16 %v464, %v456
    %v673 = vpack.c.b16 %v465, %v457
    %v674 = vpack.c.b16 %v466, %v458
    %v675 = vpack.c.b16 %v467, %v459
    %v676 = vpack.c.b16 %v468, %v460
    %v677 = vpack.c.b16 %v469, %v461
    %v678 = vpack.c.b16 %v470, %v462
    %v679 = vpack.c.b16 %v479, %v471
    %v680 = vpack.c.b16 %v480, %v472
    %v681 = vpack.c.b16 %v481, %v473
    %v682 = vpack.c.b16 %v482, %v474
    %v683 = vpack.c.b16 %v483, %v475
    %v684 = vpack.c.b16 %v484, %v476
    %v685 = vpack.c.b16 %v485, %v477
    %v686 = vpack.c.b16 %v486, %v478
    %v687 = vpack.c.b16 %v495, %v487
    %v688 = vpack.c.b16 %v496, %v488
    %v689 = vpack.c.b16 %v497, %v489
    %v690 = vpack.c.b16 %v498, %v490
    %v691 = vpack.c.b16 %v499, %v491
    %v692 = vpack.c.b16 %v500, %v492
    %v693 = vpack.c.b16 %v501, %v493
    %v694 = vpack.c.b16 %v502, %v494
    %v695 = vpack.c.b16 %v511, %v503
    %v696 = vpack.c.b16 %v512, %v504
    %v697 = vpack.c.b16 %v513, %v505
    %v698 = vpack.c.b16 %v514, %v506
    %v699 = vpack.c.b16 %v515, %v507
    %v700 = vpack.c.b16 %v516, %v508
    %v701 = vpack.c.b16 %v517, %v509
    %v702 = vpack.c.b16 %v518, %v510
    %v703 = vpack.c.b16 %v527, %v519
    %v704 = vpack.c.b16 %v528, %v520
    %v705 = vpack.c.b16 %v529, %v521
    %v706 = vpack.c.b16 %v530, %v522
    %v707 = vpack.c.b16 %v531, %v523
    %v708 = vpack.c.b16 %v532, %v524
    %v709 = vpack.c.b16 %v533, %v525
    %v710 = vpack.c.b16 %v534, %v526
    %v711 = vpack.c.b16 %v543, %v535
    %v712 = vpack.c.b16 %v544, %v536
    %v713 = vpack.c.b16 %v545, %v537
    %v714 = vpack.c.b16 %v546, %v538
    %v715 = vpack.c.b16 %v547, %v539
    %v716 = vpack.c.b16 %v548, %v540
    %v717 = vpack.c.b16 %v549, %v541
    %v718 = vpack.c.b16 %v550, %v542
    %v719 = vpack.c.b16 %v559, %v551
    %v720 = vpack.c.b16 %v560, %v552
    %v721 = vpack.c.b16 %v561, %v553
    %v722 = vpack.c.b16 %v562, %v554
    %v723 = vpack.c.b16 %v563, %v555
    %v724 = vpack.c.b16 %v564, %v556
    %v725 = vpack.c.b16 %v565, %v557
    %v726 = vpack.c.b16 %v566, %v558
    %v727 = vpack.c.b16 %v575, %v567
    %v728 = vpack.c.b16 %v576, %v568
    %v729 = vpack.c.b16 %v577, %v569
    %v730 = vpack.c.b16 %v578, %v570
    %v731 = vpack.c.b16 %v579, %v571
    %v732 = vpack.c.b16 %v580, %v572
    %v733 = vpack.c.b16 %v581, %v573
    %v734 = vpack.c.b16 %v582, %v574
    %v735 = vpack.c.b16 %v591, %v583
    %v736 = vpack.c.b16 %v592, %v584
    %v737 = vpack.c.b16 %v593, %v585
    %v738 = vpack.c.b16 %v594, %v586
    %v739 = vpack.c.b16 %v595, %v587
    %v740 = vpack.c.b16 %v596, %v588
    %v741 = vpack.c.b16 %v597, %v589
    %v742 = vpack.c.b16 %v598, %v590
    %v743 = vpack.c.b16 %v607, %v599
    %v744 = vpack.c.b16 %v608, %v600
    %v745 = vpack.c.b16 %v609, %v601
    %v746 = vpack.c.b16 %v610, %v602
    %v747 = vpack.c.b16 %v611, %v603
    %v748 = vpack.c.b16 %v612, %v604
    %v749 = vpack.c.b16 %v613, %v605
    %v750 = vpack.c.b16 %v614, %v606
    %v751 = vpack.c.b16 %v623, %v615
    %v752 = vpack.c.b16 %v624, %v616
    %v753 = vpack.c.b16 %v625, %v617
    %v754 = vpack.c.b16 %v626, %v618
    %v755 = vpack.c.b16 %v627, %v619
    %v756 = vpack.c.b16 %v628, %v620
    %v757 = vpack.c.b16 %v629, %v621
    %v758 = vpack.c.b16 %v630, %v622
    %887 = vmatprep.subr.bf16.mxu0 %v688
    %888 = vmatpush1.bf16.msra.mxu0 %v687
    %889 = vmatprep.subr.bf16.mxu0 %v680
    %890 = vmatpush1.bf16.msra.mxu0 %v679
    %891 = vmatprep.subr.bf16.mxu0 %v672
    %892 = vmatpush1.bf16.msra.mxu0 %v671
    %893 = vmatprep.subr.bf16.mxu0 %v664
    %894 = vmatpush1.bf16.msra.mxu0 %v663
    %895 = vmatprep.subr.bf16.mxu0 %v656
    %896 = vmatpush1.bf16.msra.mxu0 %v655
    %897 = vmatprep.subr.bf16.mxu0 %v648
    %898 = vmatpush1.bf16.msra.mxu0 %v647
    %899 = vmatprep.subr.bf16.mxu0 %v640
    %900 = vmatpush1.bf16.msra.mxu0 %v639
    %901 = vmatprep.subr.bf16.mxu0 %v632
    %902 = vmatpush1.bf16.msra.mxu0 %v631
    %903 = vmatprep.subr.bf16.mxu0 %v752
    %904 = vmatpush2.bf16.msra.mxu0 %v751
    %905 = vmatprep.subr.bf16.mxu0 %v744
    %906 = vmatpush2.bf16.msra.mxu0 %v743
    %907 = vmatprep.subr.bf16.mxu0 %v736
    %908 = vmatpush2.bf16.msra.mxu0 %v735
    %909 = vmatprep.subr.bf16.mxu0 %v728
    %910 = vmatpush2.bf16.msra.mxu0 %v727
    %911 = vmatprep.subr.bf16.mxu0 %v720
    %912 = vmatpush2.bf16.msra.mxu0 %v719
    %913 = vmatprep.subr.bf16.mxu0 %v712
    %914 = vmatpush2.bf16.msra.mxu0 %v711
    %915 = vmatprep.subr.bf16.mxu0 %v704
    %916 = vmatpush2.bf16.msra.mxu0 %v703
    %917 = vmatprep.subr.bf16.mxu0 %v696
    %918 = vmatpush2.bf16.msra.mxu0 %v695
    %919 = vmatprep.mubr.bf16.mxu0 %v76
    %920 = vmatmul.mubr.bf16.gmra.mxu0 %v75
    %v921 = vpop.f32.mrf.mxu0
    %v922 = vadd.f32 %v210, %v921
    %v923 = vpop.f32.mrf.mxu0
    %v924 = vadd.f32 %v214, %v923
    %v925 = vpop.f32.mrf.mxu0
    %v926 = vpop.f32.mrf.mxu0
    %927 = vdwg.mxu0
    %928 = vmatprep.subr.bf16.mxu0 %v690
    %929 = vmatpush1.bf16.msra.mxu0 %v689
    %930 = vmatprep.subr.bf16.mxu0 %v682
    %931 = vmatpush1.bf16.msra.mxu0 %v681
    %932 = vmatprep.subr.bf16.mxu0 %v674
    %933 = vmatpush1.bf16.msra.mxu0 %v673
    %934 = vmatprep.subr.bf16.mxu0 %v666
    %935 = vmatpush1.bf16.msra.mxu0 %v665
    %936 = vmatprep.subr.bf16.mxu0 %v658
    %937 = vmatpush1.bf16.msra.mxu0 %v657
    %938 = vmatprep.subr.bf16.mxu0 %v650
    %939 = vmatpush1.bf16.msra.mxu0 %v649
    %940 = vmatprep.subr.bf16.mxu0 %v642
    %941 = vmatpush1.bf16.msra.mxu0 %v641
    %942 = vmatprep.subr.bf16.mxu0 %v634
    %943 = vmatpush1.bf16.msra.mxu0 %v633
    %944 = vmatprep.subr.bf16.mxu0 %v754
    %945 = vmatpush2.bf16.msra.mxu0 %v753
    %946 = vmatprep.subr.bf16.mxu0 %v746
    %947 = vmatpush2.bf16.msra.mxu0 %v745
    %948 = vmatprep.subr.bf16.mxu0 %v738
    %949 = vmatpush2.bf16.msra.mxu0 %v737
    %950 = vmatprep.subr.bf16.mxu0 %v730
    %951 = vmatpush2.bf16.msra.mxu0 %v729
    %952 = vmatprep.subr.bf16.mxu0 %v722
    %953 = vmatpush2.bf16.msra.mxu0 %v721
    %954 = vmatprep.subr.bf16.mxu0 %v714
    %955 = vmatpush2.bf16.msra.mxu0 %v713
    %956 = vmatprep.subr.bf16.mxu0 %v706
    %957 = vmatpush2.bf16.msra.mxu0 %v705
    %958 = vmatprep.subr.bf16.mxu0 %v698
    %959 = vmatpush2.bf16.msra.mxu0 %v697
    %960 = vmatprep.mubr.bf16.mxu0 %v76
    %961 = vmatmul.mubr.bf16.gmra.mxu0 %v75
    %v962 = vpop.f32.mrf.mxu0
    %v963 = vadd.f32 %v218, %v962
    %v964 = vpop.f32.mrf.mxu0
    %v965 = vadd.f32 %v222, %v964
    %v966 = vpop.f32.mrf.mxu0
    %v967 = vpop.f32.mrf.mxu0
    %968 = vdwg.mxu0
    %969 = vmatprep.subr.bf16.mxu0 %v692
    %970 = vmatpush1.bf16.msra.mxu0 %v691
    %971 = vmatprep.subr.bf16.mxu0 %v684
    %972 = vmatpush1.bf16.msra.mxu0 %v683
    %973 = vmatprep.subr.bf16.mxu0 %v676
    %974 = vmatpush1.bf16.msra.mxu0 %v675
    %975 = vmatprep.subr.bf16.mxu0 %v668
    %976 = vmatpush1.bf16.msra.mxu0 %v667
    %977 = vmatprep.subr.bf16.mxu0 %v660
    %978 = vmatpush1.bf16.msra.mxu0 %v659
    %979 = vmatprep.subr.bf16.mxu0 %v652
    %980 = vmatpush1.bf16.msra.mxu0 %v651
    %981 = vmatprep.subr.bf16.mxu0 %v644
    %982 = vmatpush1.bf16.msra.mxu0 %v643
    %983 = vmatprep.subr.bf16.mxu0 %v636
    %984 = vmatpush1.bf16.msra.mxu0 %v635
    %985 = vmatprep.subr.bf16.mxu0 %v756
    %986 = vmatpush2.bf16.msra.mxu0 %v755
    %987 = vmatprep.subr.bf16.mxu0 %v748
    %988 = vmatpush2.bf16.msra.mxu0 %v747
    %989 = vmatprep.subr.bf16.mxu0 %v740
    %990 = vmatpush2.bf16.msra.mxu0 %v739
    %991 = vmatprep.subr.bf16.mxu0 %v732
    %992 = vmatpush2.bf16.msra.mxu0 %v731
    %993 = vmatprep.subr.bf16.mxu0 %v724
    %994 = vmatpush2.bf16.msra.mxu0 %v723
    %995 = vmatprep.subr.bf16.mxu0 %v716
    %996 = vmatpush2.bf16.msra.mxu0 %v715
    %997 = vmatprep.subr.bf16.mxu0 %v708
    %998 = vmatpush2.bf16.msra.mxu0 %v707
    %999 = vmatprep.subr.bf16.mxu0 %v700
    %1000 = vmatpush2.bf16.msra.mxu0 %v699
    %1001 = vmatprep.mubr.bf16.mxu0 %v76
    %1002 = vmatmul.mubr.bf16.gmra.mxu0 %v75
    %v1003 = vpop.f32.mrf.mxu0
    %v1004 = vadd.f32 %v226, %v1003
    %v1005 = vpop.f32.mrf.mxu0
    %v1006 = vadd.f32 %v230, %v1005
    %v1007 = vpop.f32.mrf.mxu0
    %v1008 = vpop.f32.mrf.mxu0
    %1009 = vdwg.mxu0
    %1010 = vmatprep.subr.bf16.mxu0 %v694
    %1011 = vmatpush1.bf16.msra.mxu0 %v693
    %1012 = vmatprep.subr.bf16.mxu0 %v686
    %1013 = vmatpush1.bf16.msra.mxu0 %v685
    %1014 = vmatprep.subr.bf16.mxu0 %v678
    %1015 = vmatpush1.bf16.msra.mxu0 %v677
    %1016 = vmatprep.subr.bf16.mxu0 %v670
    %1017 = vmatpush1.bf16.msra.mxu0 %v669
    %1018 = vmatprep.subr.bf16.mxu0 %v662
    %1019 = vmatpush1.bf16.msra.mxu0 %v661
    %1020 = vmatprep.subr.bf16.mxu0 %v654
    %1021 = vmatpush1.bf16.msra.mxu0 %v653
    %1022 = vmatprep.subr.bf16.mxu0 %v646
    %1023 = vmatpush1.bf16.msra.mxu0 %v645
    %1024 = vmatprep.subr.bf16.mxu0 %v638
    %1025 = vmatpush1.bf16.msra.mxu0 %v637
    %1026 = vmatprep.subr.bf16.mxu0 %v758
    %1027 = vmatpush2.bf16.msra.mxu0 %v757
    %1028 = vmatprep.subr.bf16.mxu0 %v750
    %1029 = vmatpush2.bf16.msra.mxu0 %v749
    %1030 = vmatprep.subr.bf16.mxu0 %v742
    %1031 = vmatpush2.bf16.msra.mxu0 %v741
    %1032 = vmatprep.subr.bf16.mxu0 %v734
    %1033 = vmatpush2.bf16.msra.mxu0 %v733
    %1034 = vmatprep.subr.bf16.mxu0 %v726
    %1035 = vmatpush2.bf16.msra.mxu0 %v725
    %1036 = vmatprep.subr.bf16.mxu0 %v718
    %1037 = vmatpush2.bf16.msra.mxu0 %v717
    %1038 = vmatprep.subr.bf16.mxu0 %v710
    %1039 = vmatpush2.bf16.msra.mxu0 %v709
    %1040 = vmatprep.subr.bf16.mxu0 %v702
    %1041 = vmatpush2.bf16.msra.mxu0 %v701
    %1042 = vmatprep.mubr.bf16.mxu0 %v76
    %1043 = vmatmul.mubr.bf16.gmra.mxu0 %v75
    %v1044 = vpop.f32.mrf.mxu0
    %v1045 = vadd.f32 %v234, %v1044
    %v1046 = vpop.f32.mrf.mxu0
    %v1047 = vadd.f32 %v238, %v1046
    %v1048 = vpop.f32.mrf.mxu0
    %v1049 = vpop.f32.mrf.mxu0
    %1050 = vdwg.mxu0
    %v1051 = vmax.f32 %v922, 0.0
    %v1052 = vmax.f32 %v924, 0.0
    %v1053 = vmax.f32 %v963, 0.0
    %v1054 = vmax.f32 %v965, 0.0
    %v1055 = vmax.f32 %v1004, 0.0
    %v1056 = vmax.f32 %v1006, 0.0
    %v1057 = vmax.f32 %v1045, 0.0
    %v1058 = vmax.f32 %v1047, 0.0
    %v1059 = vpack.c.bf16 %v1051, %v1051
    %v1060 = vpack.c.bf16 %v1052, %v1052
    %v1061 = vpack.c.bf16 %v1053, %v1053
    %v1062 = vpack.c.bf16 %v1054, %v1054
    %v1063 = vpack.c.bf16 %v1055, %v1055
    %v1064 = vpack.c.bf16 %v1056, %v1056
    %v1065 = vpack.c.bf16 %v1057, %v1057
    %v1066 = vpack.c.bf16 %v1058, %v1058
    %v1067 = vld [vmem:[#allocation8] sm:$0xf]
    %v1068 = vld [vmem:[#allocation8 + $0x4] sm:$0xf]
    %v1069 = vld [vmem:[#allocation8 + $0x8] sm:$0xf]
    %v1070 = vld [vmem:[#allocation8 + $0xc] sm:$0xf]
    %v1071 = vld [vmem:[#allocation8 + $0x10] sm:$0xf]
    %v1072 = vld [vmem:[#allocation8 + $0x14] sm:$0xf]
    %v1073 = vld [vmem:[#allocation8 + $0x18] sm:$0xf]
    %v1074 = vld [vmem:[#allocation8 + $0x1c] sm:$0xf]
    %v1075 = vld [vmem:[#allocation8 + $0x20] sm:$0xf]
    %v1076 = vld [vmem:[#allocation8 + $0x24] sm:$0xf]
    %v1077 = vld [vmem:[#allocation8 + $0x28] sm:$0xf]
    %v1078 = vld [vmem:[#allocation8 + $0x2c] sm:$0xf]
    %v1079 = vld [vmem:[#allocation8 + $0x30] sm:$0xf]
    %v1080 = vld [vmem:[#allocation8 + $0x34] sm:$0xf]
    %v1081 = vld [vmem:[#allocation8 + $0x38] sm:$0xf]
    %v1082 = vld [vmem:[#allocation8 + $0x3c] sm:$0xf]
    %v1083 = vld [vmem:[#allocation8 + $0x40] sm:$0xf]
    %v1084 = vld [vmem:[#allocation8 + $0x44] sm:$0xf]
    %v1085 = vld [vmem:[#allocation8 + $0x48] sm:$0xf]
    %v1086 = vld [vmem:[#allocation8 + $0x4c] sm:$0xf]
    %v1087 = vld [vmem:[#allocation8 + $0x50] sm:$0xf]
    %v1088 = vld [vmem:[#allocation8 + $0x54] sm:$0xf]
    %v1089 = vld [vmem:[#allocation8 + $0x58] sm:$0xf]
    %v1090 = vld [vmem:[#allocation8 + $0x5c] sm:$0xf]
    %v1091 = vld [vmem:[#allocation8 + $0x60] sm:$0xf]
    %v1092 = vld [vmem:[#allocation8 + $0x64] sm:$0xf]
    %v1093 = vld [vmem:[#allocation8 + $0x68] sm:$0xf]
    %v1094 = vld [vmem:[#allocation8 + $0x6c] sm:$0xf]
    %v1095 = vld [vmem:[#allocation8 + $0x70] sm:$0xf]
    %v1096 = vld [vmem:[#allocation8 + $0x74] sm:$0xf]
    %v1097 = vld [vmem:[#allocation8 + $0x78] sm:$0xf]
    %v1098 = vld [vmem:[#allocation8 + $0x7c] sm:$0xf]
    %v1099 = vld [vmem:[#allocation8 + $0x80] sm:$0xf]
    %v1100 = vld [vmem:[#allocation8 + $0x84] sm:$0xf]
    %v1101 = vld [vmem:[#allocation8 + $0x88] sm:$0xf]
    %v1102 = vld [vmem:[#allocation8 + $0x8c] sm:$0xf]
    %v1103 = vld [vmem:[#allocation8 + $0x90] sm:$0xf]
    %v1104 = vld [vmem:[#allocation8 + $0x94] sm:$0xf]
    %v1105 = vld [vmem:[#allocation8 + $0x98] sm:$0xf]
    %v1106 = vld [vmem:[#allocation8 + $0x9c] sm:$0xf]
    %v1107 = vld [vmem:[#allocation8 + $0xa0] sm:$0xf]
    %v1108 = vld [vmem:[#allocation8 + $0xa4] sm:$0xf]
    %v1109 = vld [vmem:[#allocation8 + $0xa8] sm:$0xf]
    %v1110 = vld [vmem:[#allocation8 + $0xac] sm:$0xf]
    %v1111 = vld [vmem:[#allocation8 + $0xb0] sm:$0xf]
    %v1112 = vld [vmem:[#allocation8 + $0xb4] sm:$0xf]
    %v1113 = vld [vmem:[#allocation8 + $0xb8] sm:$0xf]
    %v1114 = vld [vmem:[#allocation8 + $0xbc] sm:$0xf]
    %v1115 = vld [vmem:[#allocation8 + $0xc0] sm:$0xf]
    %v1116 = vld [vmem:[#allocation8 + $0xc4] sm:$0xf]
    %v1117 = vld [vmem:[#allocation8 + $0xc8] sm:$0xf]
    %v1118 = vld [vmem:[#allocation8 + $0xcc] sm:$0xf]
    %v1119 = vld [vmem:[#allocation8 + $0xd0] sm:$0xf]
    %v1120 = vld [vmem:[#allocation8 + $0xd4] sm:$0xf]
    %v1121 = vld [vmem:[#allocation8 + $0xd8] sm:$0xf]
    %v1122 = vld [vmem:[#allocation8 + $0xdc] sm:$0xf]
    %v1123 = vld [vmem:[#allocation8 + $0xe0] sm:$0xf]
    %v1124 = vld [vmem:[#allocation8 + $0xe4] sm:$0xf]
    %v1125 = vld [vmem:[#allocation8 + $0xe8] sm:$0xf]
    %v1126 = vld [vmem:[#allocation8 + $0xec] sm:$0xf]
    %v1127 = vld [vmem:[#allocation8 + $0xf0] sm:$0xf]
    %v1128 = vld [vmem:[#allocation8 + $0xf4] sm:$0xf]
    %v1129 = vld [vmem:[#allocation8 + $0xf8] sm:$0xf]
    %v1130 = vld [vmem:[#allocation8 + $0xfc] sm:$0xf]
    %v1131 = vld [vmem:[#allocation8 + $0x100] sm:$0xf]
    %v1132 = vld [vmem:[#allocation8 + $0x104] sm:$0xf]
    %v1133 = vld [vmem:[#allocation8 + $0x108] sm:$0xf]
    %v1134 = vld [vmem:[#allocation8 + $0x10c] sm:$0xf]
    %v1135 = vld [vmem:[#allocation8 + $0x110] sm:$0xf]
    %v1136 = vld [vmem:[#allocation8 + $0x114] sm:$0xf]
    %v1137 = vld [vmem:[#allocation8 + $0x118] sm:$0xf]
    %v1138 = vld [vmem:[#allocation8 + $0x11c] sm:$0xf]
    %v1139 = vld [vmem:[#allocation8 + $0x120] sm:$0xf]
    %v1140 = vld [vmem:[#allocation8 + $0x124] sm:$0xf]
    %v1141 = vld [vmem:[#allocation8 + $0x128] sm:$0xf]
    %v1142 = vld [vmem:[#allocation8 + $0x12c] sm:$0xf]
    %v1143 = vld [vmem:[#allocation8 + $0x130] sm:$0xf]
    %v1144 = vld [vmem:[#allocation8 + $0x134] sm:$0xf]
    %v1145 = vld [vmem:[#allocation8 + $0x138] sm:$0xf]
    %v1146 = vld [vmem:[#allocation8 + $0x13c] sm:$0xf]
    %v1147 = vld [vmem:[#allocation8 + $0x140] sm:$0xf]
    %v1148 = vld [vmem:[#allocation8 + $0x144] sm:$0xf]
    %v1149 = vld [vmem:[#allocation8 + $0x148] sm:$0xf]
    %v1150 = vld [vmem:[#allocation8 + $0x14c] sm:$0xf]
    %v1151 = vld [vmem:[#allocation8 + $0x150] sm:$0xf]
    %v1152 = vld [vmem:[#allocation8 + $0x154] sm:$0xf]
    %v1153 = vld [vmem:[#allocation8 + $0x158] sm:$0xf]
    %v1154 = vld [vmem:[#allocation8 + $0x15c] sm:$0xf]
    %v1155 = vld [vmem:[#allocation8 + $0x160] sm:$0xf]
    %v1156 = vld [vmem:[#allocation8 + $0x164] sm:$0xf]
    %v1157 = vld [vmem:[#allocation8 + $0x168] sm:$0xf]
    %v1158 = vld [vmem:[#allocation8 + $0x16c] sm:$0xf]
    %v1159 = vld [vmem:[#allocation8 + $0x170] sm:$0xf]
    %v1160 = vld [vmem:[#allocation8 + $0x174] sm:$0xf]
    %v1161 = vld [vmem:[#allocation8 + $0x178] sm:$0xf]
    %v1162 = vld [vmem:[#allocation8 + $0x17c] sm:$0xf]
    %v1163 = vld [vmem:[#allocation8 + $0x180] sm:$0xf]
    %v1164 = vld [vmem:[#allocation8 + $0x184] sm:$0xf]
    %v1165 = vld [vmem:[#allocation8 + $0x188] sm:$0xf]
    %v1166 = vld [vmem:[#allocation8 + $0x18c] sm:$0xf]
    %v1167 = vld [vmem:[#allocation8 + $0x190] sm:$0xf]
    %v1168 = vld [vmem:[#allocation8 + $0x194] sm:$0xf]
    %v1169 = vld [vmem:[#allocation8 + $0x198] sm:$0xf]
    %v1170 = vld [vmem:[#allocation8 + $0x19c] sm:$0xf]
    %v1171 = vld [vmem:[#allocation8 + $0x1a0] sm:$0xf]
    %v1172 = vld [vmem:[#allocation8 + $0x1a4] sm:$0xf]
    %v1173 = vld [vmem:[#allocation8 + $0x1a8] sm:$0xf]
    %v1174 = vld [vmem:[#allocation8 + $0x1ac] sm:$0xf]
    %v1175 = vld [vmem:[#allocation8 + $0x1b0] sm:$0xf]
    %v1176 = vld [vmem:[#allocation8 + $0x1b4] sm:$0xf]
    %v1177 = vld [vmem:[#allocation8 + $0x1b8] sm:$0xf]
    %v1178 = vld [vmem:[#allocation8 + $0x1bc] sm:$0xf]
    %v1179 = vld [vmem:[#allocation8 + $0x1c0] sm:$0xf]
    %v1180 = vld [vmem:[#allocation8 + $0x1c4] sm:$0xf]
    %v1181 = vld [vmem:[#allocation8 + $0x1c8] sm:$0xf]
    %v1182 = vld [vmem:[#allocation8 + $0x1cc] sm:$0xf]
    %v1183 = vld [vmem:[#allocation8 + $0x1d0] sm:$0xf]
    %v1184 = vld [vmem:[#allocation8 + $0x1d4] sm:$0xf]
    %v1185 = vld [vmem:[#allocation8 + $0x1d8] sm:$0xf]
    %v1186 = vld [vmem:[#allocation8 + $0x1dc] sm:$0xf]
    %v1187 = vld [vmem:[#allocation8 + $0x1e0] sm:$0xf]
    %v1188 = vld [vmem:[#allocation8 + $0x1e4] sm:$0xf]
    %v1189 = vld [vmem:[#allocation8 + $0x1e8] sm:$0xf]
    %v1190 = vld [vmem:[#allocation8 + $0x1ec] sm:$0xf]
    %v1191 = vld [vmem:[#allocation8 + $0x1f0] sm:$0xf]
    %v1192 = vld [vmem:[#allocation8 + $0x1f4] sm:$0xf]
    %v1193 = vld [vmem:[#allocation8 + $0x1f8] sm:$0xf]
    %v1194 = vld [vmem:[#allocation8 + $0x1fc] sm:$0xf]
    %v1195 = vld [vmem:[%s4] sm:$0x1]
    %v1197 = vlaneseq
    %v1198 = vshrl.u32 %v1197, 7
    %v1199 = vsub.s32 0, %v1198
    %v1200 = vrot.slane %v1195, %v1199
    %v1330 = vunpack.c.l.b16 %v1067
    %v1331 = vunpack.c.l.b16 %v1068
    %v1332 = vunpack.c.l.b16 %v1069
    %v1333 = vunpack.c.l.b16 %v1070
    %v1334 = vunpack.c.l.b16 %v1071
    %v1335 = vunpack.c.l.b16 %v1072
    %v1336 = vunpack.c.l.b16 %v1073
    %v1337 = vunpack.c.l.b16 %v1074
    %v1338 = vunpack.c.l.b16 %v1075
    %v1339 = vunpack.c.l.b16 %v1076
    %v1340 = vunpack.c.l.b16 %v1077
    %v1341 = vunpack.c.l.b16 %v1078
    %v1342 = vunpack.c.l.b16 %v1079
    %v1343 = vunpack.c.l.b16 %v1080
    %v1344 = vunpack.c.l.b16 %v1081
    %v1345 = vunpack.c.l.b16 %v1082
    %v1346 = vunpack.c.l.b16 %v1083
    %v1347 = vunpack.c.l.b16 %v1084
    %v1348 = vunpack.c.l.b16 %v1085
    %v1349 = vunpack.c.l.b16 %v1086
    %v1350 = vunpack.c.l.b16 %v1087
    %v1351 = vunpack.c.l.b16 %v1088
    %v1352 = vunpack.c.l.b16 %v1089
    %v1353 = vunpack.c.l.b16 %v1090
    %v1354 = vunpack.c.l.b16 %v1091
    %v1355 = vunpack.c.l.b16 %v1092
    %v1356 = vunpack.c.l.b16 %v1093
    %v1357 = vunpack.c.l.b16 %v1094
    %v1358 = vunpack.c.l.b16 %v1095
    %v1359 = vunpack.c.l.b16 %v1096
    %v1360 = vunpack.c.l.b16 %v1097
    %v1361 = vunpack.c.l.b16 %v1098
    %v1362 = vunpack.c.l.b16 %v1099
    %v1363 = vunpack.c.l.b16 %v1100
    %v1364 = vunpack.c.l.b16 %v1101
    %v1365 = vunpack.c.l.b16 %v1102
    %v1366 = vunpack.c.l.b16 %v1103
    %v1367 = vunpack.c.l.b16 %v1104
    %v1368 = vunpack.c.l.b16 %v1105
    %v1369 = vunpack.c.l.b16 %v1106
    %v1370 = vunpack.c.l.b16 %v1107
    %v1371 = vunpack.c.l.b16 %v1108
    %v1372 = vunpack.c.l.b16 %v1109
    %v1373 = vunpack.c.l.b16 %v1110
    %v1374 = vunpack.c.l.b16 %v1111
    %v1375 = vunpack.c.l.b16 %v1112
    %v1376 = vunpack.c.l.b16 %v1113
    %v1377 = vunpack.c.l.b16 %v1114
    %v1378 = vunpack.c.l.b16 %v1115
    %v1379 = vunpack.c.l.b16 %v1116
    %v1380 = vunpack.c.l.b16 %v1117
    %v1381 = vunpack.c.l.b16 %v1118
    %v1382 = vunpack.c.l.b16 %v1119
    %v1383 = vunpack.c.l.b16 %v1120
    %v1384 = vunpack.c.l.b16 %v1121
    %v1385 = vunpack.c.l.b16 %v1122
    %v1386 = vunpack.c.l.b16 %v1123
    %v1387 = vunpack.c.l.b16 %v1124
    %v1388 = vunpack.c.l.b16 %v1125
    %v1389 = vunpack.c.l.b16 %v1126
    %v1390 = vunpack.c.l.b16 %v1127
    %v1391 = vunpack.c.l.b16 %v1128
    %v1392 = vunpack.c.l.b16 %v1129
    %v1393 = vunpack.c.l.b16 %v1130
    %v1394 = vunpack.c.l.b16 %v1131
    %v1395 = vunpack.c.l.b16 %v1132
    %v1396 = vunpack.c.l.b16 %v1133
    %v1397 = vunpack.c.l.b16 %v1134
    %v1398 = vunpack.c.l.b16 %v1135
    %v1399 = vunpack.c.l.b16 %v1136
    %v1400 = vunpack.c.l.b16 %v1137
    %v1401 = vunpack.c.l.b16 %v1138
    %v1402 = vunpack.c.l.b16 %v1139
    %v1403 = vunpack.c.l.b16 %v1140
    %v1404 = vunpack.c.l.b16 %v1141
    %v1405 = vunpack.c.l.b16 %v1142
    %v1406 = vunpack.c.l.b16 %v1143
    %v1407 = vunpack.c.l.b16 %v1144
    %v1408 = vunpack.c.l.b16 %v1145
    %v1409 = vunpack.c.l.b16 %v1146
    %v1410 = vunpack.c.l.b16 %v1147
    %v1411 = vunpack.c.l.b16 %v1148
    %v1412 = vunpack.c.l.b16 %v1149
    %v1413 = vunpack.c.l.b16 %v1150
    %v1414 = vunpack.c.l.b16 %v1151
    %v1415 = vunpack.c.l.b16 %v1152
    %v1416 = vunpack.c.l.b16 %v1153
    %v1417 = vunpack.c.l.b16 %v1154
    %v1418 = vunpack.c.l.b16 %v1155
    %v1419 = vunpack.c.l.b16 %v1156
    %v1420 = vunpack.c.l.b16 %v1157
    %v1421 = vunpack.c.l.b16 %v1158
    %v1422 = vunpack.c.l.b16 %v1159
    %v1423 = vunpack.c.l.b16 %v1160
    %v1424 = vunpack.c.l.b16 %v1161
    %v1425 = vunpack.c.l.b16 %v1162
    %v1426 = vunpack.c.l.b16 %v1163
    %v1427 = vunpack.c.l.b16 %v1164
    %v1428 = vunpack.c.l.b16 %v1165
    %v1429 = vunpack.c.l.b16 %v1166
    %v1430 = vunpack.c.l.b16 %v1167
    %v1431 = vunpack.c.l.b16 %v1168
    %v1432 = vunpack.c.l.b16 %v1169
    %v1433 = vunpack.c.l.b16 %v1170
    %v1434 = vunpack.c.l.b16 %v1171
    %v1435 = vunpack.c.l.b16 %v1172
    %v1436 = vunpack.c.l.b16 %v1173
    %v1437 = vunpack.c.l.b16 %v1174
    %v1438 = vunpack.c.l.b16 %v1175
    %v1439 = vunpack.c.l.b16 %v1176
    %v1440 = vunpack.c.l.b16 %v1177
    %v1441 = vunpack.c.l.b16 %v1178
    %v1442 = vunpack.c.l.b16 %v1179
    %v1443 = vunpack.c.l.b16 %v1180
    %v1444 = vunpack.c.l.b16 %v1181
    %v1445 = vunpack.c.l.b16 %v1182
    %v1446 = vunpack.c.l.b16 %v1183
    %v1447 = vunpack.c.l.b16 %v1184
    %v1448 = vunpack.c.l.b16 %v1185
    %v1449 = vunpack.c.l.b16 %v1186
    %v1450 = vunpack.c.l.b16 %v1187
    %v1451 = vunpack.c.l.b16 %v1188
    %v1452 = vunpack.c.l.b16 %v1189
    %v1453 = vunpack.c.l.b16 %v1190
    %v1454 = vunpack.c.l.b16 %v1191
    %v1455 = vunpack.c.l.b16 %v1192
    %v1456 = vunpack.c.l.b16 %v1193
    %v1457 = vunpack.c.l.b16 %v1194
    %v1458 = vpack.c.b16 %v1331, %v1330
    %v1459 = vpack.c.b16 %v1333, %v1332
    %v1460 = vpack.c.b16 %v1335, %v1334
    %v1461 = vpack.c.b16 %v1337, %v1336
    %v1462 = vpack.c.b16 %v1339, %v1338
    %v1463 = vpack.c.b16 %v1341, %v1340
    %v1464 = vpack.c.b16 %v1343, %v1342
    %v1465 = vpack.c.b16 %v1345, %v1344
    %v1466 = vpack.c.b16 %v1347, %v1346
    %v1467 = vpack.c.b16 %v1349, %v1348
    %v1468 = vpack.c.b16 %v1351, %v1350
    %v1469 = vpack.c.b16 %v1353, %v1352
    %v1470 = vpack.c.b16 %v1355, %v1354
    %v1471 = vpack.c.b16 %v1357, %v1356
    %v1472 = vpack.c.b16 %v1359, %v1358
    %v1473 = vpack.c.b16 %v1361, %v1360
    %v1474 = vpack.c.b16 %v1363, %v1362
    %v1475 = vpack.c.b16 %v1365, %v1364
    %v1476 = vpack.c.b16 %v1367, %v1366
    %v1477 = vpack.c.b16 %v1369, %v1368
    %v1478 = vpack.c.b16 %v1371, %v1370
    %v1479 = vpack.c.b16 %v1373, %v1372
    %v1480 = vpack.c.b16 %v1375, %v1374
    %v1481 = vpack.c.b16 %v1377, %v1376
    %v1482 = vpack.c.b16 %v1379, %v1378
    %v1483 = vpack.c.b16 %v1381, %v1380
    %v1484 = vpack.c.b16 %v1383, %v1382
    %v1485 = vpack.c.b16 %v1385, %v1384
    %v1486 = vpack.c.b16 %v1387, %v1386
    %v1487 = vpack.c.b16 %v1389, %v1388
    %v1488 = vpack.c.b16 %v1391, %v1390
    %v1489 = vpack.c.b16 %v1393, %v1392
    %v1490 = vpack.c.b16 %v1395, %v1394
    %v1491 = vpack.c.b16 %v1397, %v1396
    %v1492 = vpack.c.b16 %v1399, %v1398
    %v1493 = vpack.c.b16 %v1401, %v1400
    %v1494 = vpack.c.b16 %v1403, %v1402
    %v1495 = vpack.c.b16 %v1405, %v1404
    %v1496 = vpack.c.b16 %v1407, %v1406
    %v1497 = vpack.c.b16 %v1409, %v1408
    %v1498 = vpack.c.b16 %v1411, %v1410
    %v1499 = vpack.c.b16 %v1413, %v1412
    %v1500 = vpack.c.b16 %v1415, %v1414
    %v1501 = vpack.c.b16 %v1417, %v1416
    %v1502 = vpack.c.b16 %v1419, %v1418
    %v1503 = vpack.c.b16 %v1421, %v1420
    %v1504 = vpack.c.b16 %v1423, %v1422
    %v1505 = vpack.c.b16 %v1425, %v1424
    %v1506 = vpack.c.b16 %v1427, %v1426
    %v1507 = vpack.c.b16 %v1429, %v1428
    %v1508 = vpack.c.b16 %v1431, %v1430
    %v1509 = vpack.c.b16 %v1433, %v1432
    %v1510 = vpack.c.b16 %v1435, %v1434
    %v1511 = vpack.c.b16 %v1437, %v1436
    %v1512 = vpack.c.b16 %v1439, %v1438
    %v1513 = vpack.c.b16 %v1441, %v1440
    %v1514 = vpack.c.b16 %v1443, %v1442
    %v1515 = vpack.c.b16 %v1445, %v1444
    %v1516 = vpack.c.b16 %v1447, %v1446
    %v1517 = vpack.c.b16 %v1449, %v1448
    %v1518 = vpack.c.b16 %v1451, %v1450
    %v1519 = vpack.c.b16 %v1453, %v1452
    %v1520 = vpack.c.b16 %v1455, %v1454
    %v1521 = vpack.c.b16 %v1457, %v1456
    %1586 = vmatprep.subr.bf16.mxu0 0
    %1587 = vmatpush1.bf16.msra.mxu0 %v1465
    %1588 = vmatprep.subr.bf16.mxu0 0
    %1589 = vmatpush1.bf16.msra.mxu0 %v1464
    %1590 = vmatprep.subr.bf16.mxu0 0
    %1591 = vmatpush1.bf16.msra.mxu0 %v1463
    %1592 = vmatprep.subr.bf16.mxu0 0
    %1593 = vmatpush1.bf16.msra.mxu0 %v1462
    %1594 = vmatprep.subr.bf16.mxu0 0
    %1595 = vmatpush1.bf16.msra.mxu0 %v1461
    %1596 = vmatprep.subr.bf16.mxu0 0
    %1597 = vmatpush1.bf16.msra.mxu0 %v1460
    %1598 = vmatprep.subr.bf16.mxu0 0
    %1599 = vmatpush1.bf16.msra.mxu0 %v1459
    %1600 = vmatprep.subr.bf16.mxu0 0
    %1601 = vmatpush1.bf16.msra.mxu0 %v1458
    %1602 = vmatprep.subr.bf16.mxu0 0
    %1603 = vmatpush2.bf16.msra.mxu0 %v1473
    %1604 = vmatprep.subr.bf16.mxu0 0
    %1605 = vmatpush2.bf16.msra.mxu0 %v1472
    %1606 = vmatprep.subr.bf16.mxu0 0
    %1607 = vmatpush2.bf16.msra.mxu0 %v1471
    %1608 = vmatprep.subr.bf16.mxu0 0
    %1609 = vmatpush2.bf16.msra.mxu0 %v1470
    %1610 = vmatprep.subr.bf16.mxu0 0
    %1611 = vmatpush2.bf16.msra.mxu0 %v1469
    %1612 = vmatprep.subr.bf16.mxu0 0
    %1613 = vmatpush2.bf16.msra.mxu0 %v1468
    %1614 = vmatprep.subr.bf16.mxu0 0
    %1615 = vmatpush2.bf16.msra.mxu0 %v1467
    %1616 = vmatprep.subr.bf16.mxu0 0
    %1617 = vmatpush2.bf16.msra.mxu0 %v1466
    %1618 = vmatprep.mubr.bf16.mxu0 %v1060
    %1619 = vmatmul.mubr.bf16.gmra.mxu0 %v1059
    %v1620 = vpop.f32.mrf.mxu0
    %v1621 = vadd.f32 %v1200, %v1620
    %v1622 = vpop.f32.mrf.mxu0
    %v1623 = vpop.f32.mrf.mxu0
    %v1624 = vpop.f32.mrf.mxu0
    %1625 = vdwg.mxu0
    %1626 = vmatprep.subr.bf16.mxu0 0
    %1627 = vmatpush1.bf16.msra.mxu0 %v1481
    %1628 = vmatprep.subr.bf16.mxu0 0
    %1629 = vmatpush1.bf16.msra.mxu0 %v1480
    %1630 = vmatprep.subr.bf16.mxu0 0
    %1631 = vmatpush1.bf16.msra.mxu0 %v1479
    %1632 = vmatprep.subr.bf16.mxu0 0
    %1633 = vmatpush1.bf16.msra.mxu0 %v1478
    %1634 = vmatprep.subr.bf16.mxu0 0
    %1635 = vmatpush1.bf16.msra.mxu0 %v1477
    %1636 = vmatprep.subr.bf16.mxu0 0
    %1637 = vmatpush1.bf16.msra.mxu0 %v1476
    %1638 = vmatprep.subr.bf16.mxu0 0
    %1639 = vmatpush1.bf16.msra.mxu0 %v1475
    %1640 = vmatprep.subr.bf16.mxu0 0
    %1641 = vmatpush1.bf16.msra.mxu0 %v1474
    %1642 = vmatprep.subr.bf16.mxu0 0
    %1643 = vmatpush2.bf16.msra.mxu0 %v1489
    %1644 = vmatprep.subr.bf16.mxu0 0
    %1645 = vmatpush2.bf16.msra.mxu0 %v1488
    %1646 = vmatprep.subr.bf16.mxu0 0
    %1647 = vmatpush2.bf16.msra.mxu0 %v1487
    %1648 = vmatprep.subr.bf16.mxu0 0
    %1649 = vmatpush2.bf16.msra.mxu0 %v1486
    %1650 = vmatprep.subr.bf16.mxu0 0
    %1651 = vmatpush2.bf16.msra.mxu0 %v1485
    %1652 = vmatprep.subr.bf16.mxu0 0
    %1653 = vmatpush2.bf16.msra.mxu0 %v1484
    %1654 = vmatprep.subr.bf16.mxu0 0
    %1655 = vmatpush2.bf16.msra.mxu0 %v1483
    %1656 = vmatprep.subr.bf16.mxu0 0
    %1657 = vmatpush2.bf16.msra.mxu0 %v1482
    %1658 = vmatprep.mubr.bf16.mxu0 %v1062
    %1659 = vmatmul.mubr.bf16.gmra.mxu0 %v1061
    %v1660 = vpop.f32.mrf.mxu0
    %v1661 = vadd.f32 %v1621, %v1660
    %v1662 = vpop.f32.mrf.mxu0
    %v1663 = vpop.f32.mrf.mxu0
    %v1664 = vpop.f32.mrf.mxu0
    %1665 = vdwg.mxu0
    %1666 = vmatprep.subr.bf16.mxu0 0
    %1667 = vmatpush1.bf16.msra.mxu0 %v1497
    %1668 = vmatprep.subr.bf16.mxu0 0
    %1669 = vmatpush1.bf16.msra.mxu0 %v1496
    %1670 = vmatprep.subr.bf16.mxu0 0
    %1671 = vmatpush1.bf16.msra.mxu0 %v1495
    %1672 = vmatprep.subr.bf16.mxu0 0
    %1673 = vmatpush1.bf16.msra.mxu0 %v1494
    %1674 = vmatprep.subr.bf16.mxu0 0
    %1675 = vmatpush1.bf16.msra.mxu0 %v1493
    %1676 = vmatprep.subr.bf16.mxu0 0
    %1677 = vmatpush1.bf16.msra.mxu0 %v1492
    %1678 = vmatprep.subr.bf16.mxu0 0
    %1679 = vmatpush1.bf16.msra.mxu0 %v1491
    %1680 = vmatprep.subr.bf16.mxu0 0
    %1681 = vmatpush1.bf16.msra.mxu0 %v1490
    %1682 = vmatprep.subr.bf16.mxu0 0
    %1683 = vmatpush2.bf16.msra.mxu0 %v1505
    %1684 = vmatprep.subr.bf16.mxu0 0
    %1685 = vmatpush2.bf16.msra.mxu0 %v1504
    %1686 = vmatprep.subr.bf16.mxu0 0
    %1687 = vmatpush2.bf16.msra.mxu0 %v1503
    %1688 = vmatprep.subr.bf16.mxu0 0
    %1689 = vmatpush2.bf16.msra.mxu0 %v1502
    %1690 = vmatprep.subr.bf16.mxu0 0
    %1691 = vmatpush2.bf16.msra.mxu0 %v1501
    %1692 = vmatprep.subr.bf16.mxu0 0
    %1693 = vmatpush2.bf16.msra.mxu0 %v1500
    %1694 = vmatprep.subr.bf16.mxu0 0
    %1695 = vmatpush2.bf16.msra.mxu0 %v1499
    %1696 = vmatprep.subr.bf16.mxu0 0
    %1697 = vmatpush2.bf16.msra.mxu0 %v1498
    %1698 = vmatprep.mubr.bf16.mxu0 %v1064
    %1699 = vmatmul.mubr.bf16.gmra.mxu0 %v1063
    %v1700 = vpop.f32.mrf.mxu0
    %v1701 = vadd.f32 %v1661, %v1700
    %v1702 = vpop.f32.mrf.mxu0
    %v1703 = vpop.f32.mrf.mxu0
    %v1704 = vpop.f32.mrf.mxu0
    %1705 = vdwg.mxu0
    %1706 = vmatprep.subr.bf16.mxu0 0
    %1707 = vmatpush1.bf16.msra.mxu0 %v1513
    %1708 = vmatprep.subr.bf16.mxu0 0
    %1709 = vmatpush1.bf16.msra.mxu0 %v1512
    %1710 = vmatprep.subr.bf16.mxu0 0
    %1711 = vmatpush1.bf16.msra.mxu0 %v1511
    %1712 = vmatprep.subr.bf16.mxu0 0
    %1713 = vmatpush1.bf16.msra.mxu0 %v1510
    %1714 = vmatprep.subr.bf16.mxu0 0
    %1715 = vmatpush1.bf16.msra.mxu0 %v1509
    %1716 = vmatprep.subr.bf16.mxu0 0
    %1717 = vmatpush1.bf16.msra.mxu0 %v1508
    %1718 = vmatprep.subr.bf16.mxu0 0
    %1719 = vmatpush1.bf16.msra.mxu0 %v1507
    %1720 = vmatprep.subr.bf16.mxu0 0
    %1721 = vmatpush1.bf16.msra.mxu0 %v1506
    %1722 = vmatprep.subr.bf16.mxu0 0
    %1723 = vmatpush2.bf16.msra.mxu0 %v1521
    %1724 = vmatprep.subr.bf16.mxu0 0
    %1725 = vmatpush2.bf16.msra.mxu0 %v1520
    %1726 = vmatprep.subr.bf16.mxu0 0
    %1727 = vmatpush2.bf16.msra.mxu0 %v1519
    %1728 = vmatprep.subr.bf16.mxu0 0
    %1729 = vmatpush2.bf16.msra.mxu0 %v1518
    %1730 = vmatprep.subr.bf16.mxu0 0
    %1731 = vmatpush2.bf16.msra.mxu0 %v1517
    %1732 = vmatprep.subr.bf16.mxu0 0
    %1733 = vmatpush2.bf16.msra.mxu0 %v1516
    %1734 = vmatprep.subr.bf16.mxu0 0
    %1735 = vmatpush2.bf16.msra.mxu0 %v1515
    %1736 = vmatprep.subr.bf16.mxu0 0
    %1737 = vmatpush2.bf16.msra.mxu0 %v1514
    %1738 = vmatprep.mubr.bf16.mxu0 %v1066
    %1739 = vmatmul.mubr.bf16.gmra.mxu0 %v1065
    %v1740 = vpop.f32.mrf.mxu0
    %v1741 = vadd.f32 %v1701, %v1740
    %v1742 = vpop.f32.mrf.mxu0
    %v1743 = vpop.f32.mrf.mxu0
    %v1744 = vpop.f32.mrf.mxu0
    %1745 = vdwg.mxu0
    %1746 = vst [vmem:[#allocation10] sm:$0xff] %v1741
    // Predicated region
    $region38: #{tpu_custom_call.1} parent=1 // pred_check
      _
    $region39: #{tpu_custom_call.1} parent=1 // pred_check_branch
      %1748 = sbr.rel (0) target = $region41
    $region40: #{tpu_custom_call.1} parent=1 // pred_region
      %s1750 = ssub.s32 128, 128
      %1751 = vsyncadd [#allocation4], %s1750
      %s1753 = sshll.u32 [#allocation10], 4
      %s1754 = int_to_ptr.vmem [resolvable:$true] %s1753
      %1756 = dma.vmem_to_hbm [thread:$0]  %s1754, 128, %s5, [#allocation4]
    $region41: #{tpu_custom_call.1} parent=1 // pred_fallthru
      _
    // Predicated region
    $region42: #{tpu_custom_call.1} parent=1 // pred_check
      _
    $region43: #{tpu_custom_call.1} parent=1 // pred_check_branch
      %1758 = sbr.rel (0) target = $region45
    $region44: #{tpu_custom_call.1} parent=1 // pred_region
      %1759 = dma.done [#allocation4], 128
    $region45: #{tpu_custom_call.1} parent=1 // pred_fallthru
      _
    %1760 = vsyncpa [#allocation3], 1
    %1761 = vsyncpa [#allocation6], 1
    %1762 = vsyncpa [#allocation9], 1
    %1763 = vsyncpa [#allocation4], 1

</llo_original>
